<compile_context>
chip_gen: v5e
topology: v5e:2x2
jax: 0.10.0
libtpu: 0.0.40
codegen_flags: <defaults>
</compile_context>

<pallas_src>
import functools
import math

import jax
import jax.numpy as jnp
from jax.experimental import pallas as pl
from jax.experimental.pallas import tpu as pltpu


def _round_up(v, m):
    return ((v + m - 1) // m) * m


def _sgc_kernel(x_ref, w_ref, b_ref, o_ref):
    # x_ref: (TM, F), w_ref: (F, C_pad)  (pre-transposed in the wrapper),
    # b_ref: (1, C_pad), o_ref: (TM, C_pad)
    acc = jnp.dot(x_ref[...], w_ref[...], preferred_element_type=jnp.float32)
    o_ref[...] = (acc + b_ref[...]).astype(o_ref.dtype)


def _pick_tm(N, F, C_pad, budget_bytes):
    """Row-tile size from a VMEM budget: 2x TM*F (x) + 2x TM*C_pad (out) double
    buffers plus single-buffered weight/bias must fit under `budget_bytes`."""
    fixed = C_pad * F * 4 + 8 * C_pad * 4            # weight (1 buf) + bias
    per_row = 2 * F * 4 + 2 * C_pad * 4              # x + out, double-buffered
    avail = max(budget_bytes - fixed, per_row * 8)
    tm = int(min(avail // per_row, 1024))
    if tm >= N:
        # Whole problem fits in one tile. Split once when there is enough work
        # so both TensorCores on v7x get rows; otherwise use the full array
        # (block_shape == full dims is always legal).
        if N >= 512:
            return min(_round_up(pl.cdiv(N, 2), 8), _round_up(N, 8))
        return N
    # >= 2 grid steps: keep TM a multiple of 8 and balance the steps.
    steps = pl.cdiv(N, tm)
    tm = _round_up(pl.cdiv(N, steps), 8)
    return max(tm, 8)


@functools.partial(jax.jit, static_argnames=("vmem_budget_bytes",))
def sgc_forward(x, weight, bias, *, vmem_budget_bytes=12 * 1024 * 1024):
    """x: [N, nfeat] f32, weight: [nclass, nfeat] f32, bias: [nclass] f32."""
    N, F = x.shape
    C, F2 = weight.shape
    assert F == F2, "feature dims must match"

    C_pad = _round_up(C, 128)          # lane-dense output stores
    TM = _pick_tm(N, F, C_pad, vmem_budget_bytes)
    grid = (pl.cdiv(N, TM),)           # ragged final block handled by Pallas

    # One-time layout plumbing: transpose weight to [F, C_pad] (natural [K, N]
    # RHS for the MXU) and pad classes; zero-padded columns are sliced off below.
    w_t = weight.T                                     # [F, C]
    if C_pad != C:
        w_t = jnp.pad(w_t, ((0, 0), (0, C_pad - C)))
        b_p = jnp.pad(bias, (0, C_pad - C))
    else:
        b_p = bias
    b2 = b_p.reshape(1, C_pad)

    # Explicit scoped-VMEM limit from the buffer formula (headroom x2), kept
    # under ~48 MiB so the same tiling stays safe on v7x's 64 MiB VMEM and above
    # v5e's 16 MiB default.
    vmem_est = (2 * TM * F + F * C_pad + 8 * C_pad + 2 * TM * C_pad) * 4
    vmem_limit = int(min(max(2 * vmem_est, 16 * 1024 * 1024), 48 * 1024 * 1024))

    cost = pl.CostEstimate(
        flops=2 * N * F * C_pad,
        transcendentals=0,
        bytes_accessed=4 * (N * F + F * C_pad + N * C_pad),
    )

    out = pl.pallas_call(
        _sgc_kernel,
        out_shape=jax.ShapeDtypeStruct((N, C_pad), x.dtype),
        grid=grid,
        in_specs=[
            # x: streamed row tiles (double-buffered by default).
            pl.BlockSpec((TM, F), lambda i: (i, 0)),
            # weight: VMEM-resident, constant block -> single buffer.
            pl.BlockSpec((F, C_pad), lambda i: (0, 0),
                         pipeline_mode=pl.Buffered(1)),
            # bias: VMEM-resident, constant block -> single buffer.
            pl.BlockSpec((1, C_pad), lambda i: (0, 0),
                         pipeline_mode=pl.Buffered(1)),
        ],
        out_specs=pl.BlockSpec((TM, C_pad), lambda i: (i, 0)),
        compiler_params=pltpu.CompilerParams(
            dimension_semantics=("parallel",),
            vmem_limit_bytes=vmem_limit,
        ),
        cost_estimate=cost,
    )(x, w_t, b2)

    return out[:, :C]


if __name__ == "__main__":
    # Small shapes consistent with SGC: N nodes, nfeat features, nclass classes.
    N, nfeat, nclass = 16, 32, 8

    key = jax.random.PRNGKey(0)
    kx, kw, kb = jax.random.split(key, 3)

    x = jax.random.normal(kx, (N, nfeat), dtype=jnp.float32)

    # Deterministic init mimicking nn.Linear's default (uniform +/- 1/sqrt(fan_in)).
    bound = 1.0 / math.sqrt(nfeat)
    weight = jax.random.uniform(kw, (nclass, nfeat), jnp.float32, -bound, bound)
    bias = jax.random.uniform(kb, (nclass,), jnp.float32, -bound, bound)

    out = sgc_forward(x, weight, bias)
    out = jax.block_until_ready(out)

    # Reference check against plain JAX.
    ref = x @ weight.T + bias
    assert out.shape == (N, nclass)
    assert jnp.allclose(out, ref, atol=1e-5, rtol=1e-5)

    print("KERNEL_OK")
</pallas_src>

<mosaic_0001>
module attributes {stable_mosaic.version = 11 : i64} {
  func.func @_sgc_kernel(%arg0: i32, %arg1: memref<16x32xf32, #tpu.memory_space<vmem>>, %arg2: memref<32x128xf32, #tpu.memory_space<vmem>>, %arg3: memref<1x128xf32, #tpu.memory_space<vmem>>, %arg4: memref<16x128xf32, #tpu.memory_space<vmem>>) attributes {dimension_semantics = [#tpu.dimension_semantics<parallel>], iteration_bounds = array<i64: 1>, scalar_prefetch = 0 : i64, scratch_operands = 0 : i64, tpu.core_type = #tpu.core_type<tc>, window_params = [{transform_indices = @transform_0, window_bounds = array<i64: 16, 32>}, {pipeline_mode = #tpu.pipeline_mode<synchronous>, transform_indices = @transform_1, window_bounds = array<i64: 32, 128>}, {pipeline_mode = #tpu.pipeline_mode<synchronous>, transform_indices = @transform_2, window_bounds = array<i64: 1, 128>}, {transform_indices = @transform_3, window_bounds = array<i64: 16, 128>}]} {
    %c0 = arith.constant 0 : index
    %c0_0 = arith.constant 0 : index
    %0 = vector.load %arg1[%c0, %c0_0] : memref<16x32xf32, #tpu.memory_space<vmem>>, vector<16x32xf32>
    %c0_1 = arith.constant 0 : index
    %c0_2 = arith.constant 0 : index
    %1 = vector.load %arg2[%c0_1, %c0_2] : memref<32x128xf32, #tpu.memory_space<vmem>>, vector<32x128xf32>
    %cst = arith.constant dense<0.000000e+00> : vector<16x128xf32>
    %2 = tpu.matmul %0, %1, %cst {dimension_numbers = #tpu.dot_dimension_numbers<[1], [0], [0], [1], [0, 0, 1, 1], [], []>} : vector<16x32xf32>, vector<32x128xf32>, vector<16x128xf32> -> vector<16x128xf32>
    %c0_3 = arith.constant 0 : index
    %c0_4 = arith.constant 0 : index
    %3 = vector.load %arg3[%c0_3, %c0_4] : memref<1x128xf32, #tpu.memory_space<vmem>>, vector<1x128xf32>
    %4 = vector.broadcast %3 : vector<1x128xf32> to vector<16x128xf32>
    %5 = arith.addf %2, %4 : vector<16x128xf32>
    %c0_5 = arith.constant 0 : index
    %c0_6 = arith.constant 0 : index
    %6 = vector.load %arg4[%c0_5, %c0_6] : memref<16x128xf32, #tpu.memory_space<vmem>>, vector<16x128xf32>
    tpu.vector_store %arg4[%c0_5, %c0_6], %5 {strides = array<i32>} : memref<16x128xf32, #tpu.memory_space<vmem>>, vector<16x128xf32>,
    return
  }
  func.func @transform_0(%arg0: i32) -> (i32, i32) {
    %c0_i32 = arith.constant 0 : i32
    %c0_i32_0 = arith.constant 0 : i32
    return %arg0, %c0_i32 : i32, i32
  }
  func.func @transform_1(%arg0: i32) -> (i32, i32) {
    %c0_i32 = arith.constant 0 : i32
    %c0_i32_0 = arith.constant 0 : i32
    %c0_i32_1 = arith.constant 0 : i32
    return %c0_i32, %c0_i32_0 : i32, i32
  }
  func.func @transform_2(%arg0: i32) -> (i32, i32) {
    %c0_i32 = arith.constant 0 : i32
    %c0_i32_0 = arith.constant 0 : i32
    %c0_i32_1 = arith.constant 0 : i32
    return %c0_i32, %c0_i32_0 : i32, i32
  }
  func.func @transform_3(%arg0: i32) -> (i32, i32) {
    %c0_i32 = arith.constant 0 : i32
    %c0_i32_0 = arith.constant 0 : i32
    return %arg0, %c0_i32 : i32, i32
  }
}

</mosaic_0001>

<llo_original>
// kernel: sgc_forward.1
$region0: #{sgc_forward.1}
  #allocation0 [shape = 'u32[]', space=smem, size = 0x4, offset = 0x4, fixed_abs, tag = 'smem constant byte address 0x4 - core index']
  #allocation1 [shape = 'u32[72,128]{1,0:T(1,128)}', space=vmem, size = 0x9000, scoped, tag = 'internal scratch']
  %s0 = inlined_call_operand.vmem [shape: f32[16,32], index: 0, kind: input, shape index: {}]
  %s1 = inlined_call_operand.vmem [shape: f32[32,128], index: 1, kind: input, shape index: {}]
  %s2 = inlined_call_operand.vmem [shape: f32[1,128], index: 2, kind: input, shape index: {}]
  %s3 = inlined_call_operand.vmem [shape: f32[16,128], index: 3, kind: output, shape index: {}]
  %s4 = sld [smem:[#allocation0]]
  $region22: #{sgc_forward.1} parent=0
    _
  %s6 = ssub.s32 1, %s4
  %s7 = scalar_select 0, %s6, %s4
  // Predicated region
  $region2: #{sgc_forward.1} parent=0 // pred_check
    _
  $region3: #{sgc_forward.1} parent=0 // pred_check_branch
    %9 = sbr.rel (0) target = $region5
  $region4: #{sgc_forward.1} parent=0 // pred_region
    _
  $region5: #{sgc_forward.1} parent=0 // pred_fallthru
    _
  // Predicated region
  $region6: #{sgc_forward.1} parent=0 // pred_check
    _
  $region7: #{sgc_forward.1} parent=0 // pred_check_branch
    %11 = sbr.rel (0) target = $region9
  $region8: #{sgc_forward.1} parent=0 // pred_region
    _
  $region9: #{sgc_forward.1} parent=0 // pred_fallthru
    _
  // Predicated region
  $region10: #{sgc_forward.1} parent=0 // pred_check
    _
  $region11: #{sgc_forward.1} parent=0 // pred_check_branch
    %13 = sbr.rel (0) target = $region13
  $region12: #{sgc_forward.1} parent=0 // pred_region
    _
  $region13: #{sgc_forward.1} parent=0 // pred_fallthru
    _
  %v14 = vld [vmem:[%s0] sm:$0xff]
  %v15 = vld [vmem:[%s0 + $0x8] sm:$0xff]
  %v16 = vld [vmem:[%s1] sm:$0xff]
  %v17 = vld [vmem:[%s1 + $0x8] sm:$0xff]
  %v18 = vld [vmem:[%s1 + $0x10] sm:$0xff]
  %v19 = vld [vmem:[%s1 + $0x18] sm:$0xff]
  %v20 = vld [vmem:[%s2] sm:$0x1]
  %v22 = vperm.slane %v20, 0
  %vm24 = vcmask 261120
  %v26 = vsel %vm24, %v14, 0
  %v29 = vsel %vm24, %v15, 0
  %31 = vmatpush.msra.mxu0 0.0
  %32 = vmatpush.msra.mxu0 0.0
  %33 = vmatpush.msra.mxu0 0.0
  %34 = vmatpush.msra.mxu0 0.0
  %35 = vmatpush.msra.mxu0 0.0
  %36 = vmatpush.msra.mxu0 0.0
  %37 = vmatpush.msra.mxu0 0.0
  %38 = vmatpush.msra.mxu0 0.0
  %39 = vmatpush.msra.mxu0 0.0
  %40 = vmatpush.msra.mxu0 0.0
  %41 = vmatpush.msra.mxu0 0.0
  %42 = vmatpush.msra.mxu0 0.0
  %43 = vmatpush.msra.mxu0 %v19
  %44 = vmatpush.msra.mxu0 %v18
  %45 = vmatpush.msra.mxu0 %v17
  %46 = vmatpush.msra.mxu0 %v16
  %47 = vmatmul.f32.gmra.mxu0 %v26
  %v48 = vpop.f32.mrf.mxu0
  %v49 = vadd.f32 %v22, %v48
  %50 = vmatmul.f32.gmra.mxu0 %v29
  %v51 = vpop.f32.mrf.mxu0
  %v52 = vadd.f32 %v22, %v51
  %53 = vdwg.mxu0
  %54 = vst [vmem:[%s3] sm:$0xff] %v49
  %55 = vst [vmem:[%s3 + $0x8] sm:$0xff] %v52
  // Predicated region
  $region14: #{sgc_forward.1} parent=0 // pred_check
    _
  $region15: #{sgc_forward.1} parent=0 // pred_check_branch
    %57 = sbr.rel (0) target = $region17
  $region16: #{sgc_forward.1} parent=0 // pred_region
    _
  $region17: #{sgc_forward.1} parent=0 // pred_fallthru
    _
  // Predicated region
  $region18: #{sgc_forward.1} parent=0 // pred_check
    _
  $region19: #{sgc_forward.1} parent=0 // pred_check_branch
    %59 = sbr.rel (0) target = $region21
  $region20: #{sgc_forward.1} parent=0 // pred_region
    _
  $region21: #{sgc_forward.1} parent=0 // pred_fallthru
    _

</llo_original>
